<compile_context>
chip_gen: v5e
topology: v5e:2x2
jax: 0.10.0
libtpu: 0.0.40
codegen_flags: <defaults>
</compile_context>

<pallas_src>
import functools

import jax
import jax.numpy as jnp
from jax.experimental import pallas as pl
from jax.experimental.pallas import tpu as pltpu

KERNEL_SIZE = 5
STRIDE = 2
PADDING = 1
LEAKY_SLOPE = 0.2
BN_EPS = 1e-5
CONV = [3, 4, 8]            # [in_channels, hidden, out_channels]
MAX_ROW_TILE = 256          # batch rows per grid step (one MXU row tile v6e/v7x)


def _out_hw(h, w):
    ho = (h + 2 * PADDING - KERNEL_SIZE) // STRIDE + 1
    wo = (w + 2 * PADDING - KERNEL_SIZE) // STRIDE + 1
    return ho, wo


def _round_up(x, m=128):
    return ((x + m - 1) // m) * m


# ----------------------------------------------------------------------------
# Pallas kernel: fully fused encoder forward
#   h   = leaky( x @ M1 + s1 )   (conv1 + bias + inference-BN folded into M1/s1)
#   out = h @ M2 + s2            (conv2 + bias)
# Matmuls run in the weights' dtype (bf16 in production) with f32 accumulation.
# ----------------------------------------------------------------------------
def _encoder_kernel(x_ref, m1_ref, s1_ref, m2_ref, s2_ref, o_ref, *, slope):
    x = x_ref[...].astype(m1_ref.dtype)                    # cheap VPU cast
    h = jnp.dot(x, m1_ref[...], preferred_element_type=jnp.float32)
    h = h + s1_ref[...]                                    # (1, K2) row broadcast
    h = jnp.where(h >= 0, h, slope * h)                    # LeakyReLU(0.2)
    h = h.astype(m2_ref.dtype)                             # native-bf16 MXU feed
    o = jnp.dot(h, m2_ref[...], preferred_element_type=jnp.float32)
    o_ref[...] = o + s2_ref[...]


def _fused_call(x2d, m1, s1, m2, s2):
    n, k1 = x2d.shape
    k2, outp = m2.shape
    tm = n if n <= MAX_ROW_TILE else MAX_ROW_TILE
    grid = (pl.cdiv(n, tm),)

    flops = 2 * n * (k1 * k2 + k2 * outp)
    bytes_accessed = int(
        sum(a.size * a.dtype.itemsize for a in (x2d, m1, s1, m2, s2))
        + n * outp * 4)

    kern = functools.partial(_encoder_kernel, slope=LEAKY_SLOPE)
    return pl.pallas_call(
        kern,
        out_shape=jax.ShapeDtypeStruct((n, outp), jnp.float32),
        grid=grid,
        in_specs=[
            pl.BlockSpec((tm, k1), lambda i: (i, 0)),       # batch-tiled input
            pl.BlockSpec((k1, k2), lambda i: (0, 0)),       # weights: resident
            pl.BlockSpec((1, k2), lambda i: (0, 0)),
            pl.BlockSpec((k2, outp), lambda i: (0, 0)),
            pl.BlockSpec((1, outp), lambda i: (0, 0)),
        ],
        out_specs=pl.BlockSpec((tm, outp), lambda i: (i, 0)),
        compiler_params=pltpu.CompilerParams(
            dimension_semantics=("parallel",)),
        cost_estimate=pl.CostEstimate(flops=flops, transcendentals=0,
                                      bytes_accessed=bytes_accessed),
    )(x2d, m1, s1, m2, s2)


# ----------------------------------------------------------------------------
# Parameter preparation (one-time, weight-only): fold each conv into a dense
# matrix acting on the flattened (Cin*H*W) input; fold BN/bias into it.
# ----------------------------------------------------------------------------
def _conv_as_matrix(w, h_in, w_in):
    """w: (Cout, Cin, k, k) -> M: (Cin*h_in*w_in, Cout*h_out*w_out)."""
    cout, cin, k, _ = w.shape
    h_out, w_out = _out_hw(h_in, w_in)
    taps = jnp.arange(k)
    rh = (jnp.arange(h_in)[None, :, None] ==
          STRIDE * jnp.arange(h_out)[None, None, :]
          + taps[:, None, None] - PADDING)
    rw = (jnp.arange(w_in)[None, :, None] ==
          STRIDE * jnp.arange(w_out)[None, None, :]
          + taps[:, None, None] - PADDING)
    # m[c,h,w,o,ho,wo] = sum_{i,j} w[o,c,i,j] * rh[i,h,ho] * rw[j,w,wo]
    m = jnp.einsum("ocij,ihy,jwx->chwoyx", w,
                   rh.astype(w.dtype), rw.astype(w.dtype))
    return m.reshape(cin * h_in * w_in, cout * h_out * w_out), (h_out, w_out)


def prepare_params(params, input_hw, weight_dtype=jnp.bfloat16):
    """Fold conv -> dense matrices, fold BN/bias, cast weights to bf16.

    Contraction dims are left at their natural (unpadded) sizes; only the
    final output column count is padded to 128 for lane-dense stores.
    """
    h0, w0 = input_hw

    # Layer 1: conv matrix with inference-BN + bias folded in.
    m1, (h1, w1) = _conv_as_matrix(params["w1"], h0, w0)
    scale = params["gamma1"] * jax.lax.rsqrt(params["var1"] + BN_EPS)
    shift = params["beta1"] - params["mean1"] * scale
    m1 = m1 * jnp.repeat(scale, h1 * w1)[None, :]
    s1 = jnp.repeat(params["b1"] * scale + shift, h1 * w1)[None, :]

    # Layer 2: conv matrix + bias row; pad output cols (72 -> 128) only.
    m2, (h2, w2) = _conv_as_matrix(params["w2"], h1, w1)
    s2 = jnp.repeat(params["b2"], h2 * w2)[None, :]
    outp = _round_up(m2.shape[1])
    m2 = jnp.pad(m2, ((0, 0), (0, outp - m2.shape[1])))
    s2 = jnp.pad(s2, ((0, 0), (0, outp - s2.shape[1])))

    return {
        "m1": m1.astype(weight_dtype),
        "s1": s1.astype(jnp.float32),
        "m2": m2.astype(weight_dtype),
        "s2": s2.astype(jnp.float32),
    }


@jax.jit
def encoder_forward_padded(x, prep):
    """Lane-dense (N, 128) output slab; columns [0, C2*H2*W2) are valid."""
    n = x.shape[0]
    x2 = x.reshape(n, -1)
    return _fused_call(x2, prep["m1"], prep["s1"], prep["m2"], prep["s2"])


@jax.jit
def encoder_forward(x, prep):
    """NCHW output matching EncoderNetwork.forward (eval mode)."""
    n, c0, h0, w0 = x.shape
    h1, w1 = _out_hw(h0, w0)
    h2, w2 = _out_hw(h1, w1)
    c2 = CONV[-1]
    out = encoder_forward_padded(x, prep)
    # NOTE: this slice is an extra XLA dispatch; consumers that can read the
    # padded slab should call encoder_forward_padded instead.
    return out[:, :c2 * h2 * w2].reshape(n, c2, h2, w2)


# ----------------------------------------------------------------------------
# Pure-JAX reference (eval-mode semantics) for the correctness check
# ----------------------------------------------------------------------------
def _ref_forward(x, p):
    def conv(x, w, b):
        y = jax.lax.conv_general_dilated(
            x, w, window_strides=(STRIDE, STRIDE),
            padding=((PADDING, PADDING), (PADDING, PADDING)),
            dimension_numbers=("NCHW", "OIHW", "NCHW"))
        return y + b[None, :, None, None]

    y = conv(x, p["w1"], p["b1"])
    y = ((y - p["mean1"][None, :, None, None])
         / jnp.sqrt(p["var1"][None, :, None, None] + BN_EPS)
         * p["gamma1"][None, :, None, None] + p["beta1"][None, :, None, None])
    y = jnp.where(y >= 0, y, LEAKY_SLOPE * y)
    return conv(y, p["w2"], p["b2"])


def _init_params(key):
    k = jax.random.split(key, 8)
    c0, c1, c2 = CONV
    ks = KERNEL_SIZE
    return {
        "w1": jax.random.normal(k[0], (c1, c0, ks, ks), jnp.float32) * 0.1,
        "b1": jax.random.normal(k[1], (c1,), jnp.float32) * 0.1,
        "gamma1": 1.0 + 0.1 * jax.random.normal(k[2], (c1,), jnp.float32),
        "beta1": 0.1 * jax.random.normal(k[3], (c1,), jnp.float32),
        "mean1": 0.1 * jax.random.normal(k[4], (c1,), jnp.float32),
        "var1": 0.5 + jax.random.uniform(k[5], (c1,), jnp.float32),
        "w2": jax.random.normal(k[6], (c2, c1, ks, ks), jnp.float32) * 0.1,
        "b2": jax.random.normal(k[7], (c2,), jnp.float32) * 0.1,
    }


if __name__ == "__main__":
    key = jax.random.PRNGKey(0)
    kx, kp = jax.random.split(key)
    # input_size = [3, 16, 16], batch = 2
    x = jax.random.normal(kx, (2, CONV[0], 16, 16), jnp.float32)
    params = _init_params(kp)
    ref = jax.block_until_ready(_ref_forward(x, params))

    # 1) f32 fold: tight check that the fold/fusion algebra is exact.
    prep_f32 = prepare_params(params, (16, 16), weight_dtype=jnp.float32)
    out_f32 = jax.block_until_ready(encoder_forward(x, prep_f32))
    assert out_f32.shape == (2, CONV[-1], 3, 3), out_f32.shape
    assert jnp.allclose(out_f32, ref, rtol=1e-4, atol=1e-4), \
        float(jnp.max(jnp.abs(out_f32 - ref)))

    # 2) bf16 weights (production path, ~2x less HBM weight traffic).
    prep_bf16 = prepare_params(params, (16, 16))
    out_bf16 = jax.block_until_ready(encoder_forward(x, prep_bf16))
    assert out_bf16.shape == (2, CONV[-1], 3, 3), out_bf16.shape
    assert jnp.allclose(out_bf16, ref, rtol=5e-2, atol=5e-2), \
        float(jnp.max(jnp.abs(out_bf16 - ref)))

    print("KERNEL_OK")
</pallas_src>

<mosaic_0001>
module attributes {stable_mosaic.version = 11 : i64} {
  func.func @_encoder_kernel(%arg0: i32, %arg1: memref<2x768xf32, #tpu.memory_space<vmem>>, %arg2: memref<768x196xf32, #tpu.memory_space<vmem>>, %arg3: memref<1x196xf32, #tpu.memory_space<vmem>>, %arg4: memref<196x128xf32, #tpu.memory_space<vmem>>, %arg5: memref<1x128xf32, #tpu.memory_space<vmem>>, %arg6: memref<2x128xf32, #tpu.memory_space<vmem>>) attributes {dimension_semantics = [#tpu.dimension_semantics<parallel>], iteration_bounds = array<i64: 1>, scalar_prefetch = 0 : i64, scratch_operands = 0 : i64, tpu.core_type = #tpu.core_type<tc>, window_params = [{transform_indices = @transform_0, window_bounds = array<i64: 2, 768>}, {pipeline_mode = #tpu.pipeline_mode<synchronous>, transform_indices = @transform_1, window_bounds = array<i64: 768, 196>}, {pipeline_mode = #tpu.pipeline_mode<synchronous>, transform_indices = @transform_2, window_bounds = array<i64: 1, 196>}, {pipeline_mode = #tpu.pipeline_mode<synchronous>, transform_indices = @transform_3, window_bounds = array<i64: 196, 128>}, {pipeline_mode = #tpu.pipeline_mode<synchronous>, transform_indices = @transform_4, window_bounds = array<i64: 1, 128>}, {transform_indices = @transform_5, window_bounds = array<i64: 2, 128>}]} {
    %c0 = arith.constant 0 : index
    %c0_0 = arith.constant 0 : index
    %0 = vector.load %arg1[%c0, %c0_0] : memref<2x768xf32, #tpu.memory_space<vmem>>, vector<2x768xf32>
    %c0_1 = arith.constant 0 : index
    %c0_2 = arith.constant 0 : index
    %1 = vector.load %arg2[%c0_1, %c0_2] : memref<768x196xf32, #tpu.memory_space<vmem>>, vector<768x196xf32>
    %cst = arith.constant dense<0.000000e+00> : vector<2x196xf32>
    %2 = tpu.matmul %0, %1, %cst {dimension_numbers = #tpu.dot_dimension_numbers<[1], [0], [0], [1], [0, 0, 1, 1], [], []>} : vector<2x768xf32>, vector<768x196xf32>, vector<2x196xf32> -> vector<2x196xf32>
    %c0_3 = arith.constant 0 : index
    %c0_4 = arith.constant 0 : index
    %3 = vector.load %arg3[%c0_3, %c0_4] : memref<1x196xf32, #tpu.memory_space<vmem>>, vector<1x196xf32>
    %4 = vector.broadcast %3 : vector<1x196xf32> to vector<2x196xf32>
    %5 = arith.addf %2, %4 : vector<2x196xf32>
    %cst_5 = arith.constant 0.000000e+00 : f32
    %6 = vector.broadcast %cst_5 : f32 to vector<2x196xf32>
    %7 = arith.cmpf oge, %5, %6 : vector<2x196xf32>
    %cst_6 = arith.constant 2.000000e-01 : f32
    %8 = vector.broadcast %cst_6 : f32 to vector<2x196xf32>
    %9 = arith.mulf %8, %5 : vector<2x196xf32>
    %10 = arith.select %7, %5, %9 : vector<2x196xi1>, vector<2x196xf32>
    %c0_7 = arith.constant 0 : index
    %c0_8 = arith.constant 0 : index
    %11 = vector.load %arg4[%c0_7, %c0_8] : memref<196x128xf32, #tpu.memory_space<vmem>>, vector<196x128xf32>
    %cst_9 = arith.constant dense<0.000000e+00> : vector<2x128xf32>
    %12 = tpu.matmul %10, %11, %cst_9 {dimension_numbers = #tpu.dot_dimension_numbers<[1], [0], [0], [1], [0, 0, 1, 1], [], []>} : vector<2x196xf32>, vector<196x128xf32>, vector<2x128xf32> -> vector<2x128xf32>
    %c0_10 = arith.constant 0 : index
    %c0_11 = arith.constant 0 : index
    %13 = vector.load %arg5[%c0_10, %c0_11] : memref<1x128xf32, #tpu.memory_space<vmem>>, vector<1x128xf32>
    %14 = vector.broadcast %13 : vector<1x128xf32> to vector<2x128xf32>
    %15 = arith.addf %12, %14 : vector<2x128xf32>
    %c0_12 = arith.constant 0 : index
    %c0_13 = arith.constant 0 : index
    %16 = vector.load %arg6[%c0_12, %c0_13] : memref<2x128xf32, #tpu.memory_space<vmem>>, vector<2x128xf32>
    tpu.vector_store %arg6[%c0_12, %c0_13], %15 {strides = array<i32>} : memref<2x128xf32, #tpu.memory_space<vmem>>, vector<2x128xf32>,
    return
  }
  func.func @transform_0(%arg0: i32) -> (i32, i32) {
    %c0_i32 = arith.constant 0 : i32
    %c0_i32_0 = arith.constant 0 : i32
    return %arg0, %c0_i32 : i32, i32
  }
  func.func @transform_1(%arg0: i32) -> (i32, i32) {
    %c0_i32 = arith.constant 0 : i32
    %c0_i32_0 = arith.constant 0 : i32
    %c0_i32_1 = arith.constant 0 : i32
    return %c0_i32, %c0_i32_0 : i32, i32
  }
  func.func @transform_2(%arg0: i32) -> (i32, i32) {
    %c0_i32 = arith.constant 0 : i32
    %c0_i32_0 = arith.constant 0 : i32
    %c0_i32_1 = arith.constant 0 : i32
    return %c0_i32, %c0_i32_0 : i32, i32
  }
  func.func @transform_3(%arg0: i32) -> (i32, i32) {
    %c0_i32 = arith.constant 0 : i32
    %c0_i32_0 = arith.constant 0 : i32
    %c0_i32_1 = arith.constant 0 : i32
    return %c0_i32, %c0_i32_0 : i32, i32
  }
  func.func @transform_4(%arg0: i32) -> (i32, i32) {
    %c0_i32 = arith.constant 0 : i32
    %c0_i32_0 = arith.constant 0 : i32
    %c0_i32_1 = arith.constant 0 : i32
    return %c0_i32, %c0_i32_0 : i32, i32
  }
  func.func @transform_5(%arg0: i32) -> (i32, i32) {
    %c0_i32 = arith.constant 0 : i32
    %c0_i32_0 = arith.constant 0 : i32
    return %arg0, %c0_i32 : i32, i32
  }
}

</mosaic_0001>

<llo_original>
// kernel: encoder_forward_padded.1
$region0: #{encoder_forward_padded.1}
  #allocation0 [shape = 'u32[]', space=smem, size = 0x4, offset = 0x4, fixed_abs, tag = 'smem constant byte address 0x4 - core index']
  #allocation1 [shape = 'u32[72,128]{1,0:T(1,128)}', space=vmem, size = 0x9000, scoped, tag = 'internal scratch']
  %s0 = inlined_call_operand.vmem [shape: f32[2,768], index: 0, kind: input, shape index: {}]
  %s1 = inlined_call_operand.vmem [shape: f32[768,196], index: 1, kind: input, shape index: {}]
  %s2 = inlined_call_operand.vmem [shape: f32[1,196], index: 2, kind: input, shape index: {}]
  %s3 = inlined_call_operand.vmem [shape: f32[196,128], index: 3, kind: input, shape index: {}]
  %s4 = inlined_call_operand.vmem [shape: f32[1,128], index: 4, kind: input, shape index: {}]
  %s5 = inlined_call_operand.hbm [shape: f32[2,128], index: 5, kind: output, shape index: {}]
  %s6 = sld [smem:[#allocation0]]
  $region30: #{encoder_forward_padded.1} parent=0
    _
  %s8 = ssub.s32 1, %s6
  %s9 = scalar_select 0, %s8, %s6
  $region1: #{encoder_forward_padded.1} parent=0
    #allocation2 [shape = 'u8[1024]{0}', space=vmem, size = 0x400, scoped, tag = 'output window, operand 0, single buffered']
    #allocation3 [shape = 's32[1]{0}', space=sflag, size = 0x4, scoped, tag = 'scoped memory for encoder_forward_padded.1']
    %10 = vsyncpa [#allocation3], 0
    // Predicated region
    $region2: #{encoder_forward_padded.1} parent=1 // pred_check
      _
    $region3: #{encoder_forward_padded.1} parent=1 // pred_check_branch
      %12 = sbr.rel (0) target = $region5
    $region4: #{encoder_forward_padded.1} parent=1 // pred_region
      _
    $region5: #{encoder_forward_padded.1} parent=1 // pred_fallthru
      _
    // Predicated region
    $region6: #{encoder_forward_padded.1} parent=1 // pred_check
      _
    $region7: #{encoder_forward_padded.1} parent=1 // pred_check_branch
      %14 = sbr.rel (0) target = $region9
    $region8: #{encoder_forward_padded.1} parent=1 // pred_region
      _
    $region9: #{encoder_forward_padded.1} parent=1 // pred_fallthru
      _
    // Predicated region
    $region10: #{encoder_forward_padded.1} parent=1 // pred_check
      _
    $region11: #{encoder_forward_padded.1} parent=1 // pred_check_branch
      %16 = sbr.rel (0) target = $region13
    $region12: #{encoder_forward_padded.1} parent=1 // pred_region
      _
    $region13: #{encoder_forward_padded.1} parent=1 // pred_fallthru
      _
    // Predicated region
    $region14: #{encoder_forward_padded.1} parent=1 // pred_check
      _
    $region15: #{encoder_forward_padded.1} parent=1 // pred_check_branch
      %18 = sbr.rel (0) target = $region17
    $region16: #{encoder_forward_padded.1} parent=1 // pred_region
      _
    $region17: #{encoder_forward_padded.1} parent=1 // pred_fallthru
      _
    // Predicated region
    $region18: #{encoder_forward_padded.1} parent=1 // pred_check
      _
    $region19: #{encoder_forward_padded.1} parent=1 // pred_check_branch
      %20 = sbr.rel (0) target = $region21
    $region20: #{encoder_forward_padded.1} parent=1 // pred_region
      _
    $region21: #{encoder_forward_padded.1} parent=1 // pred_fallthru
      _
    %v21 = vld [vmem:[%s0] sm:$0xff]
    %v22 = vld [vmem:[%s0 + $0x8] sm:$0xf]
    %v23 = vld [vmem:[%s1] sm:$0xff]
    %v24 = vld [vmem:[%s1 + $0x8] sm:$0xff]
    %v25 = vld [vmem:[%s1 + $0x10] sm:$0xff]
    %v26 = vld [vmem:[%s1 + $0x18] sm:$0xff]
    %v27 = vld [vmem:[%s1 + $0x20] sm:$0xff]
    %v28 = vld [vmem:[%s1 + $0x28] sm:$0xff]
    %v29 = vld [vmem:[%s1 + $0x30] sm:$0xff]
    %v30 = vld [vmem:[%s1 + $0x38] sm:$0xff]
    %v31 = vld [vmem:[%s1 + $0x40] sm:$0xff]
    %v32 = vld [vmem:[%s1 + $0x48] sm:$0xff]
    %v33 = vld [vmem:[%s1 + $0x50] sm:$0xff]
    %v34 = vld [vmem:[%s1 + $0x58] sm:$0xff]
    %v35 = vld [vmem:[%s1 + $0x60] sm:$0xff]
    %v36 = vld [vmem:[%s1 + $0x68] sm:$0xff]
    %v37 = vld [vmem:[%s1 + $0x70] sm:$0xff]
    %v38 = vld [vmem:[%s1 + $0x78] sm:$0xff]
    %v39 = vld [vmem:[%s1 + $0x80] sm:$0xff]
    %v40 = vld [vmem:[%s1 + $0x88] sm:$0xff]
    %v41 = vld [vmem:[%s1 + $0x90] sm:$0xff]
    %v42 = vld [vmem:[%s1 + $0x98] sm:$0xff]
    %v43 = vld [vmem:[%s1 + $0xa0] sm:$0xff]
    %v44 = vld [vmem:[%s1 + $0xa8] sm:$0xff]
    %v45 = vld [vmem:[%s1 + $0xb0] sm:$0xff]
    %v46 = vld [vmem:[%s1 + $0xb8] sm:$0xff]
    %v47 = vld [vmem:[%s1 + $0xc0] sm:$0xff]
    %v48 = vld [vmem:[%s1 + $0xc8] sm:$0xff]
    %v49 = vld [vmem:[%s1 + $0xd0] sm:$0xff]
    %v50 = vld [vmem:[%s1 + $0xd8] sm:$0xff]
    %v51 = vld [vmem:[%s1 + $0xe0] sm:$0xff]
    %v52 = vld [vmem:[%s1 + $0xe8] sm:$0xff]
    %v53 = vld [vmem:[%s1 + $0xf0] sm:$0xff]
    %v54 = vld [vmem:[%s1 + $0xf8] sm:$0xff]
    %v55 = vld [vmem:[%s1 + $0x100] sm:$0xff]
    %v56 = vld [vmem:[%s1 + $0x108] sm:$0xff]
    %v57 = vld [vmem:[%s1 + $0x110] sm:$0xff]
    %v58 = vld [vmem:[%s1 + $0x118] sm:$0xff]
    %v59 = vld [vmem:[%s1 + $0x120] sm:$0xff]
    %v60 = vld [vmem:[%s1 + $0x128] sm:$0xff]
    %v61 = vld [vmem:[%s1 + $0x130] sm:$0xff]
    %v62 = vld [vmem:[%s1 + $0x138] sm:$0xff]
    %v63 = vld [vmem:[%s1 + $0x140] sm:$0xff]
    %v64 = vld [vmem:[%s1 + $0x148] sm:$0xff]
    %v65 = vld [vmem:[%s1 + $0x150] sm:$0xff]
    %v66 = vld [vmem:[%s1 + $0x158] sm:$0xff]
    %v67 = vld [vmem:[%s1 + $0x160] sm:$0xff]
    %v68 = vld [vmem:[%s1 + $0x168] sm:$0xff]
    %v69 = vld [vmem:[%s1 + $0x170] sm:$0xff]
    %v70 = vld [vmem:[%s1 + $0x178] sm:$0xff]
    %v71 = vld [vmem:[%s1 + $0x180] sm:$0xff]
    %v72 = vld [vmem:[%s1 + $0x188] sm:$0xff]
    %v73 = vld [vmem:[%s1 + $0x190] sm:$0xff]
    %v74 = vld [vmem:[%s1 + $0x198] sm:$0xff]
    %v75 = vld [vmem:[%s1 + $0x1a0] sm:$0xff]
    %v76 = vld [vmem:[%s1 + $0x1a8] sm:$0xff]
    %v77 = vld [vmem:[%s1 + $0x1b0] sm:$0xff]
    %v78 = vld [vmem:[%s1 + $0x1b8] sm:$0xff]
    %v79 = vld [vmem:[%s1 + $0x1c0] sm:$0xff]
    %v80 = vld [vmem:[%s1 + $0x1c8] sm:$0xff]
    %v81 = vld [vmem:[%s1 + $0x1d0] sm:$0xff]
    %v82 = vld [vmem:[%s1 + $0x1d8] sm:$0xff]
    %v83 = vld [vmem:[%s1 + $0x1e0] sm:$0xff]
    %v84 = vld [vmem:[%s1 + $0x1e8] sm:$0xff]
    %v85 = vld [vmem:[%s1 + $0x1f0] sm:$0xff]
    %v86 = vld [vmem:[%s1 + $0x1f8] sm:$0xff]
    %v87 = vld [vmem:[%s1 + $0x200] sm:$0xff]
    %v88 = vld [vmem:[%s1 + $0x208] sm:$0xff]
    %v89 = vld [vmem:[%s1 + $0x210] sm:$0xff]
    %v90 = vld [vmem:[%s1 + $0x218] sm:$0xff]
    %v91 = vld [vmem:[%s1 + $0x220] sm:$0xff]
    %v92 = vld [vmem:[%s1 + $0x228] sm:$0xff]
    %v93 = vld [vmem:[%s1 + $0x230] sm:$0xff]
    %v94 = vld [vmem:[%s1 + $0x238] sm:$0xff]
    %v95 = vld [vmem:[%s1 + $0x240] sm:$0xff]
    %v96 = vld [vmem:[%s1 + $0x248] sm:$0xff]
    %v97 = vld [vmem:[%s1 + $0x250] sm:$0xff]
    %v98 = vld [vmem:[%s1 + $0x258] sm:$0xff]
    %v99 = vld [vmem:[%s1 + $0x260] sm:$0xff]
    %v100 = vld [vmem:[%s1 + $0x268] sm:$0xff]
    %v101 = vld [vmem:[%s1 + $0x270] sm:$0xff]
    %v102 = vld [vmem:[%s1 + $0x278] sm:$0xff]
    %v103 = vld [vmem:[%s1 + $0x280] sm:$0xff]
    %v104 = vld [vmem:[%s1 + $0x288] sm:$0xff]
    %v105 = vld [vmem:[%s1 + $0x290] sm:$0xff]
    %v106 = vld [vmem:[%s1 + $0x298] sm:$0xff]
    %v107 = vld [vmem:[%s1 + $0x2a0] sm:$0xff]
    %v108 = vld [vmem:[%s1 + $0x2a8] sm:$0xff]
    %v109 = vld [vmem:[%s1 + $0x2b0] sm:$0xff]
    %v110 = vld [vmem:[%s1 + $0x2b8] sm:$0xff]
    %v111 = vld [vmem:[%s1 + $0x2c0] sm:$0xff]
    %v112 = vld [vmem:[%s1 + $0x2c8] sm:$0xff]
    %v113 = vld [vmem:[%s1 + $0x2d0] sm:$0xff]
    %v114 = vld [vmem:[%s1 + $0x2d8] sm:$0xff]
    %v115 = vld [vmem:[%s1 + $0x2e0] sm:$0xff]
    %v116 = vld [vmem:[%s1 + $0x2e8] sm:$0xff]
    %v117 = vld [vmem:[%s1 + $0x2f0] sm:$0xff]
    %v118 = vld [vmem:[%s1 + $0x2f8] sm:$0xff]
    %v119 = vld [vmem:[%s1 + $0x300] sm:$0xff]
    %v120 = vld [vmem:[%s1 + $0x308] sm:$0xff]
    %v121 = vld [vmem:[%s1 + $0x310] sm:$0xff]
    %v122 = vld [vmem:[%s1 + $0x318] sm:$0xff]
    %v123 = vld [vmem:[%s1 + $0x320] sm:$0xff]
    %v124 = vld [vmem:[%s1 + $0x328] sm:$0xff]
    %v125 = vld [vmem:[%s1 + $0x330] sm:$0xff]
    %v126 = vld [vmem:[%s1 + $0x338] sm:$0xff]
    %v127 = vld [vmem:[%s1 + $0x340] sm:$0xff]
    %v128 = vld [vmem:[%s1 + $0x348] sm:$0xff]
    %v129 = vld [vmem:[%s1 + $0x350] sm:$0xff]
    %v130 = vld [vmem:[%s1 + $0x358] sm:$0xff]
    %v131 = vld [vmem:[%s1 + $0x360] sm:$0xff]
    %v132 = vld [vmem:[%s1 + $0x368] sm:$0xff]
    %v133 = vld [vmem:[%s1 + $0x370] sm:$0xff]
    %v134 = vld [vmem:[%s1 + $0x378] sm:$0xff]
    %v135 = vld [vmem:[%s1 + $0x380] sm:$0xff]
    %v136 = vld [vmem:[%s1 + $0x388] sm:$0xff]
    %v137 = vld [vmem:[%s1 + $0x390] sm:$0xff]
    %v138 = vld [vmem:[%s1 + $0x398] sm:$0xff]
    %v139 = vld [vmem:[%s1 + $0x3a0] sm:$0xff]
    %v140 = vld [vmem:[%s1 + $0x3a8] sm:$0xff]
    %v141 = vld [vmem:[%s1 + $0x3b0] sm:$0xff]
    %v142 = vld [vmem:[%s1 + $0x3b8] sm:$0xff]
    %v143 = vld [vmem:[%s1 + $0x3c0] sm:$0xff]
    %v144 = vld [vmem:[%s1 + $0x3c8] sm:$0xff]
    %v145 = vld [vmem:[%s1 + $0x3d0] sm:$0xff]
    %v146 = vld [vmem:[%s1 + $0x3d8] sm:$0xff]
    %v147 = vld [vmem:[%s1 + $0x3e0] sm:$0xff]
    %v148 = vld [vmem:[%s1 + $0x3e8] sm:$0xff]
    %v149 = vld [vmem:[%s1 + $0x3f0] sm:$0xff]
    %v150 = vld [vmem:[%s1 + $0x3f8] sm:$0xff]
    %v151 = vld [vmem:[%s1 + $0x400] sm:$0xff]
    %v152 = vld [vmem:[%s1 + $0x408] sm:$0xff]
    %v153 = vld [vmem:[%s1 + $0x410] sm:$0xff]
    %v154 = vld [vmem:[%s1 + $0x418] sm:$0xff]
    %v155 = vld [vmem:[%s1 + $0x420] sm:$0xff]
    %v156 = vld [vmem:[%s1 + $0x428] sm:$0xff]
    %v157 = vld [vmem:[%s1 + $0x430] sm:$0xff]
    %v158 = vld [vmem:[%s1 + $0x438] sm:$0xff]
    %v159 = vld [vmem:[%s1 + $0x440] sm:$0xff]
    %v160 = vld [vmem:[%s1 + $0x448] sm:$0xff]
    %v161 = vld [vmem:[%s1 + $0x450] sm:$0xff]
    %v162 = vld [vmem:[%s1 + $0x458] sm:$0xff]
    %v163 = vld [vmem:[%s1 + $0x460] sm:$0xff]
    %v164 = vld [vmem:[%s1 + $0x468] sm:$0xff]
    %v165 = vld [vmem:[%s1 + $0x470] sm:$0xff]
    %v166 = vld [vmem:[%s1 + $0x478] sm:$0xff]
    %v167 = vld [vmem:[%s1 + $0x480] sm:$0xff]
    %v168 = vld [vmem:[%s1 + $0x488] sm:$0xff]
    %v169 = vld [vmem:[%s1 + $0x490] sm:$0xff]
    %v170 = vld [vmem:[%s1 + $0x498] sm:$0xff]
    %v171 = vld [vmem:[%s1 + $0x4a0] sm:$0xff]
    %v172 = vld [vmem:[%s1 + $0x4a8] sm:$0xff]
    %v173 = vld [vmem:[%s1 + $0x4b0] sm:$0xff]
    %v174 = vld [vmem:[%s1 + $0x4b8] sm:$0xff]
    %v175 = vld [vmem:[%s1 + $0x4c0] sm:$0xff]
    %v176 = vld [vmem:[%s1 + $0x4c8] sm:$0xff]
    %v177 = vld [vmem:[%s1 + $0x4d0] sm:$0xff]
    %v178 = vld [vmem:[%s1 + $0x4d8] sm:$0xff]
    %v179 = vld [vmem:[%s1 + $0x4e0] sm:$0xff]
    %v180 = vld [vmem:[%s1 + $0x4e8] sm:$0xff]
    %v181 = vld [vmem:[%s1 + $0x4f0] sm:$0xff]
    %v182 = vld [vmem:[%s1 + $0x4f8] sm:$0xff]
    %v183 = vld [vmem:[%s1 + $0x500] sm:$0xff]
    %v184 = vld [vmem:[%s1 + $0x508] sm:$0xff]
    %v185 = vld [vmem:[%s1 + $0x510] sm:$0xff]
    %v186 = vld [vmem:[%s1 + $0x518] sm:$0xff]
    %v187 = vld [vmem:[%s1 + $0x520] sm:$0xff]
    %v188 = vld [vmem:[%s1 + $0x528] sm:$0xff]
    %v189 = vld [vmem:[%s1 + $0x530] sm:$0xff]
    %v190 = vld [vmem:[%s1 + $0x538] sm:$0xff]
    %v191 = vld [vmem:[%s1 + $0x540] sm:$0xff]
    %v192 = vld [vmem:[%s1 + $0x548] sm:$0xff]
    %v193 = vld [vmem:[%s1 + $0x550] sm:$0xff]
    %v194 = vld [vmem:[%s1 + $0x558] sm:$0xff]
    %v195 = vld [vmem:[%s1 + $0x560] sm:$0xff]
    %v196 = vld [vmem:[%s1 + $0x568] sm:$0xff]
    %v197 = vld [vmem:[%s1 + $0x570] sm:$0xff]
    %v198 = vld [vmem:[%s1 + $0x578] sm:$0xff]
    %v199 = vld [vmem:[%s1 + $0x580] sm:$0xff]
    %v200 = vld [vmem:[%s1 + $0x588] sm:$0xff]
    %v201 = vld [vmem:[%s1 + $0x590] sm:$0xff]
    %v202 = vld [vmem:[%s1 + $0x598] sm:$0xff]
    %v203 = vld [vmem:[%s1 + $0x5a0] sm:$0xff]
    %v204 = vld [vmem:[%s1 + $0x5a8] sm:$0xff]
    %v205 = vld [vmem:[%s1 + $0x5b0] sm:$0xff]
    %v206 = vld [vmem:[%s1 + $0x5b8] sm:$0xff]
    %v207 = vld [vmem:[%s1 + $0x5c0] sm:$0xff]
    %v208 = vld [vmem:[%s1 + $0x5c8] sm:$0xff]
    %v209 = vld [vmem:[%s1 + $0x5d0] sm:$0xff]
    %v210 = vld [vmem:[%s1 + $0x5d8] sm:$0xff]
    %v211 = vld [vmem:[%s1 + $0x5e0] sm:$0xff]
    %v212 = vld [vmem:[%s1 + $0x5e8] sm:$0xff]
    %v213 = vld [vmem:[%s1 + $0x5f0] sm:$0xff]
    %v214 = vld [vmem:[%s1 + $0x5f8] sm:$0xff]
    %v215 = vld [vmem:[%s2] sm:$0x3]
    %v217 = vperm.slane %v215, 0
    %v218 = vperm.slane %v215, 1
    %223 = vst [vmem:[#allocation1] ss:$4 sm:$0xff] %v21
    %s224 = scalar_lea.vmem [#allocation1], 32
    %225 = vst [vmem:[%s224] ss:$4 sm:$0xff] %v22
    %v226 = vld.sshfl [vmem:[#allocation1] sm:$0xff pattern:$0x73625140]
    %v227 = vld.sshfl [vmem:[#allocation1 + $0x8] sm:$0xff pattern:$0x73625140]
    %v228 = vld.sshfl [vmem:[#allocation1 + $0x10] sm:$0xff pattern:$0x73625140]
    %v229 = vld.sshfl [vmem:[#allocation1 + $0x18] sm:$0xff pattern:$0x73625140]
    %v230 = vld.sshfl [vmem:[#allocation1 + $0x20] sm:$0xff pattern:$0x73625140]
    %v231 = vld.sshfl [vmem:[#allocation1 + $0x28] sm:$0xff pattern:$0x73625140]
    %238 = vmatpush.msra.mxu0 %v53
    %239 = vmatpush.msra.mxu0 %v51
    %240 = vmatpush.msra.mxu0 %v49
    %241 = vmatpush.msra.mxu0 %v47
    %242 = vmatpush.msra.mxu0 %v45
    %243 = vmatpush.msra.mxu0 %v43
    %244 = vmatpush.msra.mxu0 %v41
    %245 = vmatpush.msra.mxu0 %v39
    %246 = vmatpush.msra.mxu0 %v37
    %247 = vmatpush.msra.mxu0 %v35
    %248 = vmatpush.msra.mxu0 %v33
    %249 = vmatpush.msra.mxu0 %v31
    %250 = vmatpush.msra.mxu0 %v29
    %251 = vmatpush.msra.mxu0 %v27
    %252 = vmatpush.msra.mxu0 %v25
    %253 = vmatpush.msra.mxu0 %v23
    %254 = vmatmul.f32.gmra.mxu0 %v226
    %v255 = vpop.f32.mrf.mxu0
    %v256 = vadd.f32 %v217, %v255
    %257 = vdwg.mxu0
    %258 = vmatpush.msra.mxu0 %v85
    %259 = vmatpush.msra.mxu0 %v83
    %260 = vmatpush.msra.mxu0 %v81
    %261 = vmatpush.msra.mxu0 %v79
    %262 = vmatpush.msra.mxu0 %v77
    %263 = vmatpush.msra.mxu0 %v75
    %264 = vmatpush.msra.mxu0 %v73
    %265 = vmatpush.msra.mxu0 %v71
    %266 = vmatpush.msra.mxu0 %v69
    %267 = vmatpush.msra.mxu0 %v67
    %268 = vmatpush.msra.mxu0 %v65
    %269 = vmatpush.msra.mxu0 %v63
    %270 = vmatpush.msra.mxu0 %v61
    %271 = vmatpush.msra.mxu0 %v59
    %272 = vmatpush.msra.mxu0 %v57
    %273 = vmatpush.msra.mxu0 %v55
    %274 = vmatmul.f32.gmra.mxu0 %v227
    %v275 = vpop.f32.mrf.mxu0
    %v276 = vadd.f32 %v256, %v275
    %277 = vdwg.mxu0
    %278 = vmatpush.msra.mxu0 %v117
    %279 = vmatpush.msra.mxu0 %v115
    %280 = vmatpush.msra.mxu0 %v113
    %281 = vmatpush.msra.mxu0 %v111
    %282 = vmatpush.msra.mxu0 %v109
    %283 = vmatpush.msra.mxu0 %v107
    %284 = vmatpush.msra.mxu0 %v105
    %285 = vmatpush.msra.mxu0 %v103
    %286 = vmatpush.msra.mxu0 %v101
    %287 = vmatpush.msra.mxu0 %v99
    %288 = vmatpush.msra.mxu0 %v97
    %289 = vmatpush.msra.mxu0 %v95
    %290 = vmatpush.msra.mxu0 %v93
    %291 = vmatpush.msra.mxu0 %v91
    %292 = vmatpush.msra.mxu0 %v89
    %293 = vmatpush.msra.mxu0 %v87
    %294 = vmatmul.f32.gmra.mxu0 %v228
    %v295 = vpop.f32.mrf.mxu0
    %v296 = vadd.f32 %v276, %v295
    %297 = vdwg.mxu0
    %298 = vmatpush.msra.mxu0 %v149
    %299 = vmatpush.msra.mxu0 %v147
    %300 = vmatpush.msra.mxu0 %v145
    %301 = vmatpush.msra.mxu0 %v143
    %302 = vmatpush.msra.mxu0 %v141
    %303 = vmatpush.msra.mxu0 %v139
    %304 = vmatpush.msra.mxu0 %v137
    %305 = vmatpush.msra.mxu0 %v135
    %306 = vmatpush.msra.mxu0 %v133
    %307 = vmatpush.msra.mxu0 %v131
    %308 = vmatpush.msra.mxu0 %v129
    %309 = vmatpush.msra.mxu0 %v127
    %310 = vmatpush.msra.mxu0 %v125
    %311 = vmatpush.msra.mxu0 %v123
    %312 = vmatpush.msra.mxu0 %v121
    %313 = vmatpush.msra.mxu0 %v119
    %314 = vmatmul.f32.gmra.mxu0 %v229
    %v315 = vpop.f32.mrf.mxu0
    %v316 = vadd.f32 %v296, %v315
    %317 = vdwg.mxu0
    %318 = vmatpush.msra.mxu0 %v181
    %319 = vmatpush.msra.mxu0 %v179
    %320 = vmatpush.msra.mxu0 %v177
    %321 = vmatpush.msra.mxu0 %v175
    %322 = vmatpush.msra.mxu0 %v173
    %323 = vmatpush.msra.mxu0 %v171
    %324 = vmatpush.msra.mxu0 %v169
    %325 = vmatpush.msra.mxu0 %v167
    %326 = vmatpush.msra.mxu0 %v165
    %327 = vmatpush.msra.mxu0 %v163
    %328 = vmatpush.msra.mxu0 %v161
    %329 = vmatpush.msra.mxu0 %v159
    %330 = vmatpush.msra.mxu0 %v157
    %331 = vmatpush.msra.mxu0 %v155
    %332 = vmatpush.msra.mxu0 %v153
    %333 = vmatpush.msra.mxu0 %v151
    %334 = vmatmul.f32.gmra.mxu0 %v230
    %v335 = vpop.f32.mrf.mxu0
    %v336 = vadd.f32 %v316, %v335
    %337 = vdwg.mxu0
    %338 = vmatpush.msra.mxu0 %v213
    %339 = vmatpush.msra.mxu0 %v211
    %340 = vmatpush.msra.mxu0 %v209
    %341 = vmatpush.msra.mxu0 %v207
    %342 = vmatpush.msra.mxu0 %v205
    %343 = vmatpush.msra.mxu0 %v203
    %344 = vmatpush.msra.mxu0 %v201
    %345 = vmatpush.msra.mxu0 %v199
    %346 = vmatpush.msra.mxu0 %v197
    %347 = vmatpush.msra.mxu0 %v195
    %348 = vmatpush.msra.mxu0 %v193
    %349 = vmatpush.msra.mxu0 %v191
    %350 = vmatpush.msra.mxu0 %v189
    %351 = vmatpush.msra.mxu0 %v187
    %352 = vmatpush.msra.mxu0 %v185
    %353 = vmatpush.msra.mxu0 %v183
    %354 = vmatmul.f32.gmra.mxu0 %v231
    %v355 = vpop.f32.mrf.mxu0
    %v356 = vadd.f32 %v336, %v355
    %357 = vdwg.mxu0
    %358 = vmatpush.msra.mxu0 %v54
    %359 = vmatpush.msra.mxu0 %v52
    %360 = vmatpush.msra.mxu0 %v50
    %361 = vmatpush.msra.mxu0 %v48
    %362 = vmatpush.msra.mxu0 %v46
    %363 = vmatpush.msra.mxu0 %v44
    %364 = vmatpush.msra.mxu0 %v42
    %365 = vmatpush.msra.mxu0 %v40
    %366 = vmatpush.msra.mxu0 %v38
    %367 = vmatpush.msra.mxu0 %v36
    %368 = vmatpush.msra.mxu0 %v34
    %369 = vmatpush.msra.mxu0 %v32
    %370 = vmatpush.msra.mxu0 %v30
    %371 = vmatpush.msra.mxu0 %v28
    %372 = vmatpush.msra.mxu0 %v26
    %373 = vmatpush.msra.mxu0 %v24
    %374 = vmatmul.f32.gmra.mxu0 %v226
    %v375 = vpop.f32.mrf.mxu0
    %v376 = vadd.f32 %v218, %v375
    %377 = vdwg.mxu0
    %378 = vmatpush.msra.mxu0 %v86
    %379 = vmatpush.msra.mxu0 %v84
    %380 = vmatpush.msra.mxu0 %v82
    %381 = vmatpush.msra.mxu0 %v80
    %382 = vmatpush.msra.mxu0 %v78
    %383 = vmatpush.msra.mxu0 %v76
    %384 = vmatpush.msra.mxu0 %v74
    %385 = vmatpush.msra.mxu0 %v72
    %386 = vmatpush.msra.mxu0 %v70
    %387 = vmatpush.msra.mxu0 %v68
    %388 = vmatpush.msra.mxu0 %v66
    %389 = vmatpush.msra.mxu0 %v64
    %390 = vmatpush.msra.mxu0 %v62
    %391 = vmatpush.msra.mxu0 %v60
    %392 = vmatpush.msra.mxu0 %v58
    %393 = vmatpush.msra.mxu0 %v56
    %394 = vmatmul.f32.gmra.mxu0 %v227
    %v395 = vpop.f32.mrf.mxu0
    %v396 = vadd.f32 %v376, %v395
    %397 = vdwg.mxu0
    %398 = vmatpush.msra.mxu0 %v118
    %399 = vmatpush.msra.mxu0 %v116
    %400 = vmatpush.msra.mxu0 %v114
    %401 = vmatpush.msra.mxu0 %v112
    %402 = vmatpush.msra.mxu0 %v110
    %403 = vmatpush.msra.mxu0 %v108
    %404 = vmatpush.msra.mxu0 %v106
    %405 = vmatpush.msra.mxu0 %v104
    %406 = vmatpush.msra.mxu0 %v102
    %407 = vmatpush.msra.mxu0 %v100
    %408 = vmatpush.msra.mxu0 %v98
    %409 = vmatpush.msra.mxu0 %v96
    %410 = vmatpush.msra.mxu0 %v94
    %411 = vmatpush.msra.mxu0 %v92
    %412 = vmatpush.msra.mxu0 %v90
    %413 = vmatpush.msra.mxu0 %v88
    %414 = vmatmul.f32.gmra.mxu0 %v228
    %v415 = vpop.f32.mrf.mxu0
    %v416 = vadd.f32 %v396, %v415
    %417 = vdwg.mxu0
    %418 = vmatpush.msra.mxu0 %v150
    %419 = vmatpush.msra.mxu0 %v148
    %420 = vmatpush.msra.mxu0 %v146
    %421 = vmatpush.msra.mxu0 %v144
    %422 = vmatpush.msra.mxu0 %v142
    %423 = vmatpush.msra.mxu0 %v140
    %424 = vmatpush.msra.mxu0 %v138
    %425 = vmatpush.msra.mxu0 %v136
    %426 = vmatpush.msra.mxu0 %v134
    %427 = vmatpush.msra.mxu0 %v132
    %428 = vmatpush.msra.mxu0 %v130
    %429 = vmatpush.msra.mxu0 %v128
    %430 = vmatpush.msra.mxu0 %v126
    %431 = vmatpush.msra.mxu0 %v124
    %432 = vmatpush.msra.mxu0 %v122
    %433 = vmatpush.msra.mxu0 %v120
    %434 = vmatmul.f32.gmra.mxu0 %v229
    %v435 = vpop.f32.mrf.mxu0
    %v436 = vadd.f32 %v416, %v435
    %437 = vdwg.mxu0
    %438 = vmatpush.msra.mxu0 %v182
    %439 = vmatpush.msra.mxu0 %v180
    %440 = vmatpush.msra.mxu0 %v178
    %441 = vmatpush.msra.mxu0 %v176
    %442 = vmatpush.msra.mxu0 %v174
    %443 = vmatpush.msra.mxu0 %v172
    %444 = vmatpush.msra.mxu0 %v170
    %445 = vmatpush.msra.mxu0 %v168
    %446 = vmatpush.msra.mxu0 %v166
    %447 = vmatpush.msra.mxu0 %v164
    %448 = vmatpush.msra.mxu0 %v162
    %449 = vmatpush.msra.mxu0 %v160
    %450 = vmatpush.msra.mxu0 %v158
    %451 = vmatpush.msra.mxu0 %v156
    %452 = vmatpush.msra.mxu0 %v154
    %453 = vmatpush.msra.mxu0 %v152
    %454 = vmatmul.f32.gmra.mxu0 %v230
    %v455 = vpop.f32.mrf.mxu0
    %v456 = vadd.f32 %v436, %v455
    %457 = vdwg.mxu0
    %458 = vmatpush.msra.mxu0 %v214
    %459 = vmatpush.msra.mxu0 %v212
    %460 = vmatpush.msra.mxu0 %v210
    %461 = vmatpush.msra.mxu0 %v208
    %462 = vmatpush.msra.mxu0 %v206
    %463 = vmatpush.msra.mxu0 %v204
    %464 = vmatpush.msra.mxu0 %v202
    %465 = vmatpush.msra.mxu0 %v200
    %466 = vmatpush.msra.mxu0 %v198
    %467 = vmatpush.msra.mxu0 %v196
    %468 = vmatpush.msra.mxu0 %v194
    %469 = vmatpush.msra.mxu0 %v192
    %470 = vmatpush.msra.mxu0 %v190
    %471 = vmatpush.msra.mxu0 %v188
    %472 = vmatpush.msra.mxu0 %v186
    %473 = vmatpush.msra.mxu0 %v184
    %474 = vmatmul.f32.gmra.mxu0 %v231
    %v475 = vpop.f32.mrf.mxu0
    %v476 = vadd.f32 %v456, %v475
    %477 = vdwg.mxu0
    %vm478 = vcmp.ge.f32.partialorder %v356, 0.0
    %vm479 = vcmp.ge.f32.partialorder %v476, 0.0
    %v480 = vmul.f32 %v356, 0.2
    %v481 = vmul.f32 %v476, 0.2
    %v482 = vsel %vm478, %v356, %v480
    %v483 = vsel %vm479, %v476, %v481
    %v484 = vld [vmem:[%s3] sm:$0xff]
    %v485 = vld [vmem:[%s3 + $0x8] sm:$0xff]
    %v486 = vld [vmem:[%s3 + $0x10] sm:$0xff]
    %v487 = vld [vmem:[%s3 + $0x18] sm:$0xff]
    %v488 = vld [vmem:[%s3 + $0x20] sm:$0xff]
    %v489 = vld [vmem:[%s3 + $0x28] sm:$0xff]
    %v490 = vld [vmem:[%s3 + $0x30] sm:$0xff]
    %v491 = vld [vmem:[%s3 + $0x38] sm:$0xff]
    %v492 = vld [vmem:[%s3 + $0x40] sm:$0xff]
    %v493 = vld [vmem:[%s3 + $0x48] sm:$0xff]
    %v494 = vld [vmem:[%s3 + $0x50] sm:$0xff]
    %v495 = vld [vmem:[%s3 + $0x58] sm:$0xff]
    %v496 = vld [vmem:[%s3 + $0x60] sm:$0xff]
    %v497 = vld [vmem:[%s3 + $0x68] sm:$0xff]
    %v498 = vld [vmem:[%s3 + $0x70] sm:$0xff]
    %v499 = vld [vmem:[%s3 + $0x78] sm:$0xff]
    %v500 = vld [vmem:[%s3 + $0x80] sm:$0xff]
    %v501 = vld [vmem:[%s3 + $0x88] sm:$0xff]
    %v502 = vld [vmem:[%s3 + $0x90] sm:$0xff]
    %v503 = vld [vmem:[%s3 + $0x98] sm:$0xff]
    %v504 = vld [vmem:[%s3 + $0xa0] sm:$0xff]
    %v505 = vld [vmem:[%s3 + $0xa8] sm:$0xff]
    %v506 = vld [vmem:[%s3 + $0xb0] sm:$0xff]
    %v507 = vld [vmem:[%s3 + $0xb8] sm:$0xff]
    %v508 = vld [vmem:[%s3 + $0xc0] sm:$0xf]
    %v509 = vld [vmem:[%s4] sm:$0x1]
    %v511 = vperm.slane %v509, 0
    %vm513 = vcmask 556032
    %v515 = vsel %vm513, %v483, 0
    %vm517 = vcmask 1043456
    %v519 = vsel %vm517, %v508, 0
    %521 = vmatpush.msra.mxu0 %v499
    %522 = vmatpush.msra.mxu0 %v498
    %523 = vmatpush.msra.mxu0 %v497
    %524 = vmatpush.msra.mxu0 %v496
    %525 = vmatpush.msra.mxu0 %v495
    %526 = vmatpush.msra.mxu0 %v494
    %527 = vmatpush.msra.mxu0 %v493
    %528 = vmatpush.msra.mxu0 %v492
    %529 = vmatpush.msra.mxu0 %v491
    %530 = vmatpush.msra.mxu0 %v490
    %531 = vmatpush.msra.mxu0 %v489
    %532 = vmatpush.msra.mxu0 %v488
    %533 = vmatpush.msra.mxu0 %v487
    %534 = vmatpush.msra.mxu0 %v486
    %535 = vmatpush.msra.mxu0 %v485
    %536 = vmatpush.msra.mxu0 %v484
    %537 = vmatmul.f32.gmra.mxu0 %v482
    %v538 = vpop.f32.mrf.mxu0
    %v539 = vadd.f32 %v511, %v538
    %540 = vdwg.mxu0
    %541 = vmatpush.msra.mxu0 0.0
    %542 = vmatpush.msra.mxu0 0.0
    %543 = vmatpush.msra.mxu0 0.0
    %544 = vmatpush.msra.mxu0 0.0
    %545 = vmatpush.msra.mxu0 0.0
    %546 = vmatpush.msra.mxu0 0.0
    %547 = vmatpush.msra.mxu0 0.0
    %548 = vmatpush.msra.mxu0 %v519
    %549 = vmatpush.msra.mxu0 %v507
    %550 = vmatpush.msra.mxu0 %v506
    %551 = vmatpush.msra.mxu0 %v505
    %552 = vmatpush.msra.mxu0 %v504
    %553 = vmatpush.msra.mxu0 %v503
    %554 = vmatpush.msra.mxu0 %v502
    %555 = vmatpush.msra.mxu0 %v501
    %556 = vmatpush.msra.mxu0 %v500
    %557 = vmatmul.f32.gmra.mxu0 %v515
    %v558 = vpop.f32.mrf.mxu0
    %v559 = vadd.f32 %v539, %v558
    %560 = vdwg.mxu0
    %561 = vst [vmem:[#allocation2] sm:$0x3] %v559
    // Predicated region
    $region22: #{encoder_forward_padded.1} parent=1 // pred_check
      _
    $region23: #{encoder_forward_padded.1} parent=1 // pred_check_branch
      %563 = sbr.rel (0) target = $region25
    $region24: #{encoder_forward_padded.1} parent=1 // pred_region
      %565 = vsyncadd [#allocation3], 0
      %s567 = sshll.u32 [#allocation2], 4
      %s568 = int_to_ptr.vmem [resolvable:$true] %s567
      %s569 = sshll.u32 %s5, 4
      %s570 = int_to_ptr.hbm [resolvable:$true] %s569
      %572 = dma.vmem_to_hbm [thread:$0]  %s568, 32, %s570, [#allocation3]
    $region25: #{encoder_forward_padded.1} parent=1 // pred_fallthru
      _
    // Predicated region
    $region26: #{encoder_forward_padded.1} parent=1 // pred_check
      _
    $region27: #{encoder_forward_padded.1} parent=1 // pred_check_branch
      %574 = sbr.rel (0) target = $region29
    $region28: #{encoder_forward_padded.1} parent=1 // pred_region
      %576 = dma.done [#allocation3], 32
    $region29: #{encoder_forward_padded.1} parent=1 // pred_fallthru
      _
    %577 = vsyncpa [#allocation3], 1

</llo_original>
